<compile_context>
chip_gen: v7x
topology: tpu7x:2x2x1
jax: 0.10.0
libtpu: 0.0.40
codegen_flags: <defaults>
</compile_context>

<pallas_src>
import functools

import jax
import jax.numpy as jnp
import numpy as np
from jax import lax
from jax.experimental import pallas as pl
from jax.experimental.pallas import tpu as pltpu

SIGMA = 0.4            # guided_sigma
ALPHA = 1.0            # guided_lambda
N_FRAMES_PER_STEP = 1  # model_config['decoder']['n_frames_per_step']

_INV_TWO_SIGMA_SQ = 1.0 / (2.0 * SIGMA * SIGMA)


def _tacotron2_loss_kernel(ilens_ref, olens_ref,
                           mel_tgt_ref, mel_out_ref, mel_post_ref,
                           gate_tgt_ref, gate_out_ref, att_ref,
                           out_ref, *, block_b):
    g = pl.program_id(0)

    # ---- mel MSE partial sums over this step's BB samples -------------------
    tgt = mel_tgt_ref[...].astype(jnp.float32)
    d1 = mel_out_ref[...].astype(jnp.float32) - tgt
    d2 = mel_post_ref[...].astype(jnp.float32) - tgt
    s_mel1 = jnp.sum(d1 * d1)
    s_mel2 = jnp.sum(d2 * d2)

    # ---- gate BCE-with-logits ------------------------------------------------
    # Gate tensors are resident (constant index_map => a single DMA for the
    # whole run); contribute the full-batch sum only once, at grid step 0.
    x = gate_out_ref[...].astype(jnp.float32)
    z = gate_tgt_ref[...].astype(jnp.float32)
    bce = jnp.maximum(x, 0.0) - x * z + jnp.log1p(jnp.exp(-jnp.abs(x)))
    s_bce = jnp.where(g == 0, jnp.sum(bce), 0.0)

    # ---- guided attention partial numerator ----------------------------------
    to, ti = att_ref.shape[1], att_ref.shape[2]
    # iota planes built once per grid step, reused for all BB samples
    t_out_i = lax.broadcasted_iota(jnp.int32, (to, ti), 0)
    t_in_i = lax.broadcasted_iota(jnp.int32, (to, ti), 1)
    t_out_f = t_out_i.astype(jnp.float32)
    t_in_f = t_in_i.astype(jnp.float32)

    s_att = jnp.float32(0.0)
    for k in range(block_b):                                   # static unroll
        ilen = ilens_ref[g * block_b + k]                      # SMEM scalar
        olen = olens_ref[g * block_b + k]
        inv_il = 1.0 / ilen.astype(jnp.float32)                # scalar recips
        inv_ol = 1.0 / olen.astype(jnp.float32)
        att_k = att_ref[k].astype(jnp.float32)                 # (T_out, T_in)
        diff = t_in_f * inv_il - t_out_f * inv_ol
        w = 1.0 - jnp.exp(diff * diff * (-_INV_TWO_SIGMA_SQ))  # exp -> EUP
        valid = jnp.logical_and(t_in_i < ilen, t_out_i < olen)
        s_att = s_att + jnp.sum(jnp.where(valid, w * att_k, 0.0))

    # ---- partial-sum output: lanes 0..3 of sublane 0 hold ---------------------
    # [sum_mse1, sum_mse2, sum_bce, sum_attn_num]; other lanes are don't-care.
    lane = lax.broadcasted_iota(jnp.int32, out_ref.shape, 2)
    out_ref[...] = jnp.where(lane == 0, s_mel1,
                   jnp.where(lane == 1, s_mel2,
                   jnp.where(lane == 2, s_bce, s_att)))


def _pick_block_batch(batch, per_sample_bytes, budget_bytes=24 * 1024 * 1024):
    """Largest samples-per-step that (double-buffered) fits the VMEM budget,
    preferring a choice whose grid length is even and >= 2 (v7x 2-TC balance)."""
    cands = [bb for bb in (8, 4, 2, 1)
             if batch % bb == 0 and 2 * bb * per_sample_bytes <= budget_bytes]
    if not cands:
        return 1
    for bb in cands:                       # descending
        g = batch // bb
        if g >= 2 and g % 2 == 0:
            return bb
    return cands[0]


def tacotron2_loss(mel_target, mel_out, mel_out_postnet,
                   gate_target, gate_out, alignments,
                   input_lengths, output_lengths, r_len_pad):
    B, T_mel, n_mels = mel_target.shape
    _, T_out, T_in = alignments.shape
    T_gate = gate_target.shape[1]

    ilens = input_lengths.astype(jnp.int32)
    olens = ((output_lengths + r_len_pad) // N_FRAMES_PER_STEP).astype(jnp.int32)

    per_sample_bytes = (3 * T_mel * n_mels * mel_target.dtype.itemsize
                        + T_out * T_in * alignments.dtype.itemsize)
    bb = _pick_block_batch(B, per_sample_bytes)
    grid = B // bb

    kernel = functools.partial(_tacotron2_loss_kernel, block_b=bb)

    grid_spec = pltpu.PrefetchScalarGridSpec(
        num_scalar_prefetch=2,
        grid=(grid,),
        in_specs=[
            # per-step blocks of bb samples; last-two dims == full array dims,
            # so no wrapper-side padding is needed.
            pl.BlockSpec((bb, T_mel, n_mels), lambda g, il, ol: (g, 0, 0)),
            pl.BlockSpec((bb, T_mel, n_mels), lambda g, il, ol: (g, 0, 0)),
            pl.BlockSpec((bb, T_mel, n_mels), lambda g, il, ol: (g, 0, 0)),
            # gate tensors: resident (constant index_map -> single DMA)
            pl.BlockSpec((B, T_gate), lambda g, il, ol: (0, 0)),
            pl.BlockSpec((B, T_gate), lambda g, il, ol: (0, 0)),
            # alignments: per-step block of bb samples
            pl.BlockSpec((bb, T_out, T_in), lambda g, il, ol: (g, 0, 0)),
        ],
        out_specs=pl.BlockSpec((1, 8, 128), lambda g, il, ol: (g, 0, 0)),
    )

    partials = pl.pallas_call(
        kernel,
        out_shape=jax.ShapeDtypeStruct((grid, 8, 128), jnp.float32),
        grid_spec=grid_spec,
        compiler_params=pltpu.CompilerParams(
            dimension_semantics=("parallel",),
            vmem_limit_bytes=48 * 1024 * 1024),
    )(ilens, olens, mel_target, mel_out, mel_out_postnet,
      gate_target, gate_out, alignments)

    # Tiny epilogue in XLA: reduce per-step partials and apply the divides.
    sums = jnp.sum(partials[:, 0, :4], axis=0)
    s_mel1, s_mel2, s_bce, s_att = sums[0], sums[1], sums[2], sums[3]

    n_mel = float(mel_target.size)
    n_gate = float(gate_target.size)
    den = jnp.sum(jnp.minimum(ilens, T_in) *
                  jnp.minimum(olens, T_out)).astype(jnp.float32)

    mel_loss = (s_mel1 + s_mel2) / n_mel
    gate_loss = s_bce / n_gate
    attn_loss = ALPHA * s_att / den
    total = mel_loss + gate_loss + attn_loss
    return total, mel_loss, gate_loss, attn_loss


def _reference(mel_target, mel_out, mel_out_postnet,
               gate_target, gate_out, alignments,
               input_lengths, output_lengths, r_len_pad):
    """Pure-JAX reference mirroring the PyTorch module."""
    mel_loss = jnp.mean((mel_out - mel_target) ** 2) + \
        jnp.mean((mel_out_postnet - mel_target) ** 2)
    x, z = gate_out, gate_target
    gate_loss = jnp.mean(jnp.maximum(x, 0) - x * z + jnp.log1p(jnp.exp(-jnp.abs(x))))

    ilens = input_lengths
    olens = (output_lengths + r_len_pad) // N_FRAMES_PER_STEP
    B, T_out, T_in = alignments.shape
    t_out = jnp.arange(T_out)[None, :, None].astype(jnp.float32)
    t_in = jnp.arange(T_in)[None, None, :].astype(jnp.float32)
    il = ilens[:, None, None].astype(jnp.float32)
    ol = olens[:, None, None].astype(jnp.float32)
    w = 1.0 - jnp.exp(-((t_in / il - t_out / ol) ** 2) / (2 * SIGMA ** 2))
    mask = (t_in < il) & (t_out < ol)
    attn_loss = ALPHA * jnp.sum(jnp.where(mask, w * alignments, 0.0)) / jnp.sum(mask)
    return mel_loss + gate_loss + attn_loss, mel_loss, gate_loss, attn_loss


if __name__ == "__main__":
    key = jax.random.PRNGKey(0)
    B, T_mel, n_mels = 2, 16, 8
    T_gate = T_mel
    T_out, T_in = 12, 10

    ks = jax.random.split(key, 6)
    mel_target = jax.random.normal(ks[0], (B, T_mel, n_mels), jnp.float32)
    mel_out = jax.random.normal(ks[1], (B, T_mel, n_mels), jnp.float32)
    mel_out_postnet = jax.random.normal(ks[2], (B, T_mel, n_mels), jnp.float32)
    gate_target = (jax.random.uniform(ks[3], (B, T_gate)) > 0.8).astype(jnp.float32)
    gate_out = jax.random.normal(ks[4], (B, T_gate), jnp.float32)
    # attention weights: row-softmax over T_in
    logits = jax.random.normal(ks[5], (B, T_out, T_in), jnp.float32)
    alignments = jax.nn.softmax(logits, axis=-1)

    input_lengths = jnp.array([10, 7], dtype=jnp.int32)   # max == T_in
    output_lengths = jnp.array([12, 9], dtype=jnp.int32)  # max == T_out (pad 0)
    r_len_pad = jnp.array([0, 0], dtype=jnp.int32)

    total, mel_l, gate_l, attn_l = jax.block_until_ready(
        tacotron2_loss(mel_target, mel_out, mel_out_postnet,
                       gate_target, gate_out, alignments,
                       input_lengths, output_lengths, r_len_pad))

    ref = _reference(mel_target, mel_out, mel_out_postnet,
                     gate_target, gate_out, alignments,
                     input_lengths, output_lengths, r_len_pad)

    np.testing.assert_allclose(np.array([total, mel_l, gate_l, attn_l]),
                               np.array(ref), rtol=1e-5, atol=1e-6)
    print("KERNEL_OK")
</pallas_src>

<mosaic_0001>
module attributes {stable_mosaic.version = 11 : i64} {
  func.func @_tacotron2_loss_kernel(%arg0: i32, %arg1: memref<2xi32, #tpu.memory_space<smem>>, %arg2: memref<2xi32, #tpu.memory_space<smem>>, %arg3: memref<1x16x8xf32, #tpu.memory_space<vmem>>, %arg4: memref<1x16x8xf32, #tpu.memory_space<vmem>>, %arg5: memref<1x16x8xf32, #tpu.memory_space<vmem>>, %arg6: memref<2x16xf32, #tpu.memory_space<vmem>>, %arg7: memref<2x16xf32, #tpu.memory_space<vmem>>, %arg8: memref<1x12x10xf32, #tpu.memory_space<vmem>>, %arg9: memref<1x8x128xf32, #tpu.memory_space<vmem>>) attributes {dimension_semantics = [#tpu.dimension_semantics<parallel>], iteration_bounds = array<i64: 2>, scalar_prefetch = 2 : i64, scratch_operands = 0 : i64, tpu.core_type = #tpu.core_type<tc>, window_params = [{transform_indices = @transform_0, window_bounds = array<i64: 1, 16, 8>}, {transform_indices = @transform_1, window_bounds = array<i64: 1, 16, 8>}, {transform_indices = @transform_2, window_bounds = array<i64: 1, 16, 8>}, {pipeline_mode = #tpu.pipeline_mode<synchronous>, transform_indices = @transform_3, window_bounds = array<i64: 2, 16>}, {pipeline_mode = #tpu.pipeline_mode<synchronous>, transform_indices = @transform_4, window_bounds = array<i64: 2, 16>}, {transform_indices = @transform_5, window_bounds = array<i64: 1, 12, 10>}, {transform_indices = @transform_6, window_bounds = array<i64: 1, 8, 128>}]} {
    %c0 = arith.constant 0 : index
    %c0_0 = arith.constant 0 : index
    %c0_1 = arith.constant 0 : index
    %0 = vector.load %arg3[%c0, %c0_0, %c0_1] : memref<1x16x8xf32, #tpu.memory_space<vmem>>, vector<1x16x8xf32>
    %c0_2 = arith.constant 0 : index
    %c0_3 = arith.constant 0 : index
    %c0_4 = arith.constant 0 : index
    %1 = vector.load %arg4[%c0_2, %c0_3, %c0_4] : memref<1x16x8xf32, #tpu.memory_space<vmem>>, vector<1x16x8xf32>
    %2 = arith.subf %1, %0 : vector<1x16x8xf32>
    %c0_5 = arith.constant 0 : index
    %c0_6 = arith.constant 0 : index
    %c0_7 = arith.constant 0 : index
    %3 = vector.load %arg5[%c0_5, %c0_6, %c0_7] : memref<1x16x8xf32, #tpu.memory_space<vmem>>, vector<1x16x8xf32>
    %4 = arith.subf %3, %0 : vector<1x16x8xf32>
    %5 = arith.mulf %2, %2 : vector<1x16x8xf32>
    %6 = vector.shape_cast %5 : vector<1x16x8xf32> to vector<1x1x16x8xf32>
    %cst = arith.constant dense<0.000000e+00> : vector<1xf32>
    %7 = vector.multi_reduction <add>, %6, %cst [1, 2, 3] : vector<1x1x16x8xf32> to vector<1xf32>
    %8 = vector.shape_cast %7 : vector<1xf32> to vector<1x1x1x1xf32>
    %9 = vector.extract %8[0, 0, 0, 0] : f32 from vector<1x1x1x1xf32>
    %10 = arith.mulf %4, %4 : vector<1x16x8xf32>
    %11 = vector.shape_cast %10 : vector<1x16x8xf32> to vector<1x1x16x8xf32>
    %cst_8 = arith.constant dense<0.000000e+00> : vector<1xf32>
    %12 = vector.multi_reduction <add>, %11, %cst_8 [1, 2, 3] : vector<1x1x16x8xf32> to vector<1xf32>
    %13 = vector.shape_cast %12 : vector<1xf32> to vector<1x1x1x1xf32>
    %14 = vector.extract %13[0, 0, 0, 0] : f32 from vector<1x1x1x1xf32>
    %c0_9 = arith.constant 0 : index
    %c0_10 = arith.constant 0 : index
    %15 = vector.load %arg7[%c0_9, %c0_10] : memref<2x16xf32, #tpu.memory_space<vmem>>, vector<2x16xf32>
    %c0_11 = arith.constant 0 : index
    %c0_12 = arith.constant 0 : index
    %16 = vector.load %arg6[%c0_11, %c0_12] : memref<2x16xf32, #tpu.memory_space<vmem>>, vector<2x16xf32>
    %cst_13 = arith.constant 0.000000e+00 : f32
    %17 = vector.broadcast %cst_13 : f32 to vector<2x16xf32>
    %18 = arith.maximumf %15, %17 : vector<2x16xf32>
    %19 = arith.mulf %15, %16 : vector<2x16xf32>
    %20 = arith.subf %18, %19 : vector<2x16xf32>
    %21 = math.absf %15 : vector<2x16xf32>
    %cst_14 = arith.constant 0.000000e+00 : f32
    %22 = vector.broadcast %cst_14 : f32 to vector<2x16xf32>
    %23 = arith.subf %22, %21 : vector<2x16xf32>
    %24 = math.exp %23 : vector<2x16xf32>
    %25 = math.log1p %24 : vector<2x16xf32>
    %26 = arith.addf %20, %25 : vector<2x16xf32>
    %c0_i32 = arith.constant 0 : i32
    %27 = arith.cmpi eq, %arg0, %c0_i32 : i32
    %28 = vector.shape_cast %26 : vector<2x16xf32> to vector<1x2x16xf32>
    %cst_15 = arith.constant dense<0.000000e+00> : vector<1xf32>
    %29 = vector.multi_reduction <add>, %28, %cst_15 [1, 2] : vector<1x2x16xf32> to vector<1xf32>
    %30 = vector.shape_cast %29 : vector<1xf32> to vector<1x1x1xf32>
    %31 = vector.extract %30[0, 0, 0] : f32 from vector<1x1x1xf32>
    %cst_16 = arith.constant 0.000000e+00 : f32
    %32 = arith.select %27, %31, %cst_16 : f32
    %33 = tpu.iota {dimensions = array<i32: 0>} : vector<12x10xi32>
    %34 = tpu.iota {dimensions = array<i32: 1>} : vector<12x10xi32>
    %35 = arith.sitofp %33 : vector<12x10xi32> to vector<12x10xf32>
    %36 = arith.sitofp %34 : vector<12x10xi32> to vector<12x10xf32>
    %c1_i32 = arith.constant 1 : i32
    %37 = arith.muli %arg0, %c1_i32 : i32
    %c0_i32_17 = arith.constant 0 : i32
    %38 = arith.addi %37, %c0_i32_17 : i32
    %39 = arith.index_cast %38 : i32 to index
    %40 = memref.load %arg1[%39] : memref<2xi32, #tpu.memory_space<smem>>
    %c1_i32_18 = arith.constant 1 : i32
    %41 = arith.muli %arg0, %c1_i32_18 : i32
    %c0_i32_19 = arith.constant 0 : i32
    %42 = arith.addi %41, %c0_i32_19 : i32
    %43 = arith.index_cast %42 : i32 to index
    %44 = memref.load %arg2[%43] : memref<2xi32, #tpu.memory_space<smem>>
    %45 = arith.sitofp %40 : i32 to f32
    %cst_20 = arith.constant 1.000000e+00 : f32
    %46 = arith.divf %cst_20, %45 : f32
    %47 = arith.sitofp %44 : i32 to f32
    %cst_21 = arith.constant 1.000000e+00 : f32
    %48 = arith.divf %cst_21, %47 : f32
    %c0_22 = arith.constant 0 : index
    %c0_23 = arith.constant 0 : index
    %c0_24 = arith.constant 0 : index
    %49 = vector.load %arg8[%c0_22, %c0_23, %c0_24] : memref<1x12x10xf32, #tpu.memory_space<vmem>>, vector<1x12x10xf32>
    %50 = vector.shape_cast %49 : vector<1x12x10xf32> to vector<12x10xf32>
    %51 = vector.broadcast %46 : f32 to vector<12x10xf32>
    %52 = arith.mulf %36, %51 : vector<12x10xf32>
    %53 = vector.broadcast %48 : f32 to vector<12x10xf32>
    %54 = arith.mulf %35, %53 : vector<12x10xf32>
    %55 = arith.subf %52, %54 : vector<12x10xf32>
    %56 = arith.mulf %55, %55 : vector<12x10xf32>
    %cst_25 = arith.constant -3.125000e+00 : f32
    %57 = vector.broadcast %cst_25 : f32 to vector<12x10xf32>
    %58 = arith.mulf %56, %57 : vector<12x10xf32>
    %59 = math.exp %58 : vector<12x10xf32>
    %cst_26 = arith.constant 1.000000e+00 : f32
    %60 = vector.broadcast %cst_26 : f32 to vector<12x10xf32>
    %61 = arith.subf %60, %59 : vector<12x10xf32>
    %62 = vector.broadcast %40 : i32 to vector<12x10xi32>
    %63 = arith.cmpi slt, %34, %62 : vector<12x10xi32>
    %64 = vector.broadcast %44 : i32 to vector<12x10xi32>
    %65 = arith.cmpi slt, %33, %64 : vector<12x10xi32>
    %66 = arith.andi %63, %65 : vector<12x10xi1>
    %67 = arith.mulf %61, %50 : vector<12x10xf32>
    %cst_27 = arith.constant 0.000000e+00 : f32
    %68 = vector.broadcast %cst_27 : f32 to vector<12x10xf32>
    %69 = arith.select %66, %67, %68 : vector<12x10xi1>, vector<12x10xf32>
    %70 = vector.shape_cast %69 : vector<12x10xf32> to vector<1x12x10xf32>
    %cst_28 = arith.constant dense<0.000000e+00> : vector<1xf32>
    %71 = vector.multi_reduction <add>, %70, %cst_28 [1, 2] : vector<1x12x10xf32> to vector<1xf32>
    %72 = vector.shape_cast %71 : vector<1xf32> to vector<1x1x1xf32>
    %73 = vector.extract %72[0, 0, 0] : f32 from vector<1x1x1xf32>
    %cst_29 = arith.constant 0.000000e+00 : f32
    %74 = arith.addf %cst_29, %73 : f32
    %75 = tpu.iota {dimensions = array<i32: 2>} : vector<1x8x128xi32>
    %c0_i32_30 = arith.constant 0 : i32
    %76 = vector.broadcast %c0_i32_30 : i32 to vector<1x8x128xi32>
    %77 = arith.cmpi eq, %75, %76 : vector<1x8x128xi32>
    %c1_i32_31 = arith.constant 1 : i32
    %78 = vector.broadcast %c1_i32_31 : i32 to vector<1x8x128xi32>
    %79 = arith.cmpi eq, %75, %78 : vector<1x8x128xi32>
    %c2_i32 = arith.constant 2 : i32
    %80 = vector.broadcast %c2_i32 : i32 to vector<1x8x128xi32>
    %81 = arith.cmpi eq, %75, %80 : vector<1x8x128xi32>
    %82 = vector.broadcast %32 : f32 to vector<1x8x128xf32>
    %83 = vector.broadcast %74 : f32 to vector<1x8x128xf32>
    %84 = arith.select %81, %82, %83 : vector<1x8x128xi1>, vector<1x8x128xf32>
    %85 = vector.broadcast %14 : f32 to vector<1x8x128xf32>
    %86 = arith.select %79, %85, %84 : vector<1x8x128xi1>, vector<1x8x128xf32>
    %87 = vector.broadcast %9 : f32 to vector<1x8x128xf32>
    %88 = arith.select %77, %87, %86 : vector<1x8x128xi1>, vector<1x8x128xf32>
    %c0_32 = arith.constant 0 : index
    %c0_33 = arith.constant 0 : index
    %c0_34 = arith.constant 0 : index
    %89 = vector.load %arg9[%c0_32, %c0_33, %c0_34] : memref<1x8x128xf32, #tpu.memory_space<vmem>>, vector<1x8x128xf32>
    tpu.vector_store %arg9[%c0_32, %c0_33, %c0_34], %88 {strides = array<i32>} : memref<1x8x128xf32, #tpu.memory_space<vmem>>, vector<1x8x128xf32>,
    return
  }
  func.func @transform_0(%arg0: i32, %arg1: memref<2xi32, #tpu.memory_space<smem>>, %arg2: memref<2xi32, #tpu.memory_space<smem>>) -> (i32, i32, i32) {
    %c0_i32 = arith.constant 0 : i32
    %c0_i32_0 = arith.constant 0 : i32
    %c0_i32_1 = arith.constant 0 : i32
    return %arg0, %c0_i32, %c0_i32_0 : i32, i32, i32
  }
  func.func @transform_1(%arg0: i32, %arg1: memref<2xi32, #tpu.memory_space<smem>>, %arg2: memref<2xi32, #tpu.memory_space<smem>>) -> (i32, i32, i32) {
    %c0_i32 = arith.constant 0 : i32
    %c0_i32_0 = arith.constant 0 : i32
    %c0_i32_1 = arith.constant 0 : i32
    return %arg0, %c0_i32, %c0_i32_0 : i32, i32, i32
  }
  func.func @transform_2(%arg0: i32, %arg1: memref<2xi32, #tpu.memory_space<smem>>, %arg2: memref<2xi32, #tpu.memory_space<smem>>) -> (i32, i32, i32) {
    %c0_i32 = arith.constant 0 : i32
    %c0_i32_0 = arith.constant 0 : i32
    %c0_i32_1 = arith.constant 0 : i32
    return %arg0, %c0_i32, %c0_i32_0 : i32, i32, i32
  }
  func.func @transform_3(%arg0: i32, %arg1: memref<2xi32, #tpu.memory_space<smem>>, %arg2: memref<2xi32, #tpu.memory_space<smem>>) -> (i32, i32) {
    %c0_i32 = arith.constant 0 : i32
    %c0_i32_0 = arith.constant 0 : i32
    %c0_i32_1 = arith.constant 0 : i32
    return %c0_i32, %c0_i32_0 : i32, i32
  }
  func.func @transform_4(%arg0: i32, %arg1: memref<2xi32, #tpu.memory_space<smem>>, %arg2: memref<2xi32, #tpu.memory_space<smem>>) -> (i32, i32) {
    %c0_i32 = arith.constant 0 : i32
    %c0_i32_0 = arith.constant 0 : i32
    %c0_i32_1 = arith.constant 0 : i32
    return %c0_i32, %c0_i32_0 : i32, i32
  }
  func.func @transform_5(%arg0: i32, %arg1: memref<2xi32, #tpu.memory_space<smem>>, %arg2: memref<2xi32, #tpu.memory_space<smem>>) -> (i32, i32, i32) {
    %c0_i32 = arith.constant 0 : i32
    %c0_i32_0 = arith.constant 0 : i32
    %c0_i32_1 = arith.constant 0 : i32
    return %arg0, %c0_i32, %c0_i32_0 : i32, i32, i32
  }
  func.func @transform_6(%arg0: i32, %arg1: memref<2xi32, #tpu.memory_space<smem>>, %arg2: memref<2xi32, #tpu.memory_space<smem>>) -> (i32, i32, i32) {
    %c0_i32 = arith.constant 0 : i32
    %c0_i32_0 = arith.constant 0 : i32
    %c0_i32_1 = arith.constant 0 : i32
    return %arg0, %c0_i32, %c0_i32_0 : i32, i32, i32
  }
}

</mosaic_0001>

<llo_original>
// kernel: tpu_custom_call.1
$region0: #{tpu_custom_call.1}
  #allocation0 [shape = 'u32[]', space=smem, size = 0x4, offset = 0x4, fixed_abs, tag = 'smem constant byte address 0x4 - core index']
  #allocation1 [shape = 'u32[144,128]{1,0:T(1,128)}', space=vmem, size = 0x12000, scoped, tag = 'internal scratch']
  #allocation2 [shape = 's32[1]{0}', space=sflag, size = 0x4, scoped, tag = 'scoped memory for tpu_custom_call.1']
  #allocation3 [shape = 'u8[512]{0}', space=smem, size = 0x200, scoped, tag = 'prefetched SMEM operand 0']
  #allocation4 [shape = 'u8[512]{0}', space=smem, size = 0x200, scoped, tag = 'prefetched SMEM operand 1']
  %s0 = inlined_call_operand.vmem [shape: s32[2], index: 0, kind: input, shape index: {}]
  %s1 = inlined_call_operand.vmem [shape: s32[2], index: 1, kind: input, shape index: {}]
  %s2 = inlined_call_operand.vmem [shape: f32[2,16,8], index: 2, kind: input, shape index: {}]
  %s3 = inlined_call_operand.vmem [shape: f32[2,16,8], index: 3, kind: input, shape index: {}]
  %s4 = inlined_call_operand.vmem [shape: f32[2,16,8], index: 4, kind: input, shape index: {}]
  %s5 = inlined_call_operand.vmem [shape: f32[2,16], index: 5, kind: input, shape index: {}]
  %s6 = inlined_call_operand.vmem [shape: f32[2,16], index: 6, kind: input, shape index: {}]
  %s7 = inlined_call_operand.vmem [shape: f32[2,12,10], index: 7, kind: input, shape index: {}]
  %s8 = inlined_call_operand.hbm [shape: f32[2,8,128], index: 8, kind: output, shape index: {}]
  %s9 = sld [smem:[#allocation0]]
  $region57: #{tpu_custom_call.1} parent=0
    _
  %s11 = ssub.s32 1, %s9
  %s12 = scalar_select 0, %s11, %s9
  %s13 = sshll.u32 %s0, 4
  %s14 = int_to_ptr.vmem [resolvable:$true] %s13
  %16 = dma.vmem_to_smem %s14, 16, [#allocation3], [#allocation2]
  %s17 = sshll.u32 %s1, 4
  %s18 = int_to_ptr.vmem [resolvable:$true] %s17
  %20 = dma.vmem_to_smem %s18, 16, [#allocation4], [#allocation2]
  %21 = dma.done [#allocation2], 32
  %22 = sfence
  $region1: #{tpu_custom_call.1} parent=0
    #allocation5 [shape = 'u8[8192]{0}', space=vmem, size = 0x2000, scoped, tag = 'output window, operand 0']
    #allocation6 [shape = 's32[2]{0}', space=sflag, size = 0x8, scoped, tag = 'scoped memory for tpu_custom_call.1']
    %23 = vsyncpa [#allocation6], 0
    %s24 = scalar_lea.sflag [#allocation6], 1
    %25 = vsyncpa %s24, 0
    loop: start=0, step=1, limit=4
    $region2: #{tpu_custom_call.1} parent=1 // loop_pre_header
      _
    $region3: #{tpu_custom_call.1} parent=1 // loop_header
      %s27 = sphi 0, %s31
      %p28 = scmp.ge.s32.totalorder %s27, 4
      %s37 = sphi 0, %s39
      %s40 = sphi 0, %s37
      %s41 = sphi 0, %s40
      %s57 = sphi 0, %s41
      %s63 = sphi 0, %s65
      %s66 = sphi 0, %s63
      %s67 = sphi 0, %s66
      %s83 = sphi 0, %s67
      %s89 = sphi 0, %s91
      %s92 = sphi 0, %s89
      %s93 = sphi 0, %s92
      %s109 = sphi 0, %s93
      %s113 = sphi 0, %s113
      %s115 = sphi 0, %s113
      %s116 = sphi 0, %s115
      %s130 = sphi 0, %s116
      %s134 = sphi 0, %s134
      %s136 = sphi 0, %s134
      %s137 = sphi 0, %s136
      %s151 = sphi 0, %s137
      %s157 = sphi 0, %s159
      %s160 = sphi 0, %s157
      %s161 = sphi 0, %s160
      %s177 = sphi 0, %s161
      %s183 = sphi 0, %s185
      %s186 = sphi 0, %s183
      %s187 = sphi 0, %s186
      %s203 = sphi 0, %s187
    $region4: #{tpu_custom_call.1} parent=1 // loop_header_branch
      %30 = sbr.rel (%p28) target = $region8
    $region5: #{tpu_custom_call.1} parent=1 // loop_body
      %s32 = ssub.s32 %s27, 1
      %s33 = ssub.s32 %s27, 2
      %s34 = sadd.s32 %s27, 1
      %s35 = ssub.s32 %s27, %s34
      %p36 = scmp.eq.s32.totalorder %s35, 0
      %s38 = sadd.s32 %s37, 1
      %s39 = scalar_select %p36, %s37, %s38
      %p42 = pneg %p36
      %p43 = scmp.eq.s32.totalorder %s27, 1
      %p44 = por %p42, %p43
      %p45 = scmp.ne.s32.totalorder %s37, %s40
      %p46 = scmp.eq.s32.totalorder %s27, 0
      %p47 = por %p45, %p46
      %p48 = scmp.ne.s32.totalorder %s37, %s40
      %p49 = scmp.eq.s32.totalorder %s32, 1
      %p50 = por %p48, %p49
      %p51 = scmp.ne.s32.totalorder %s40, %s41
      %p52 = scmp.eq.s32.totalorder %s32, 0
      %p53 = por %p51, %p52
      %p54 = scmp.ne.s32.totalorder %s40, %s41
      %p55 = scmp.eq.s32.totalorder %s33, 1
      %p56 = por %p54, %p55
      %p58 = scmp.ne.s32.totalorder %s41, %s57
      %p59 = scmp.eq.s32.totalorder %s33, 0
      %p60 = por %p58, %p59
      %s61 = ssub.s32 %s27, %s34
      %p62 = scmp.eq.s32.totalorder %s61, 0
      %s64 = sadd.s32 %s63, 1
      %s65 = scalar_select %p62, %s63, %s64
      %p68 = pneg %p62
      %p69 = scmp.eq.s32.totalorder %s27, 1
      %p70 = por %p68, %p69
      %p71 = scmp.ne.s32.totalorder %s63, %s66
      %p72 = scmp.eq.s32.totalorder %s27, 0
      %p73 = por %p71, %p72
      %p74 = scmp.ne.s32.totalorder %s63, %s66
      %p75 = scmp.eq.s32.totalorder %s32, 1
      %p76 = por %p74, %p75
      %p77 = scmp.ne.s32.totalorder %s66, %s67
      %p78 = scmp.eq.s32.totalorder %s32, 0
      %p79 = por %p77, %p78
      %p80 = scmp.ne.s32.totalorder %s66, %s67
      %p81 = scmp.eq.s32.totalorder %s33, 1
      %p82 = por %p80, %p81
      %p84 = scmp.ne.s32.totalorder %s67, %s83
      %p85 = scmp.eq.s32.totalorder %s33, 0
      %p86 = por %p84, %p85
      %s87 = ssub.s32 %s27, %s34
      %p88 = scmp.eq.s32.totalorder %s87, 0
      %s90 = sadd.s32 %s89, 1
      %s91 = scalar_select %p88, %s89, %s90
      %p94 = pneg %p88
      %p95 = scmp.eq.s32.totalorder %s27, 1
      %p96 = por %p94, %p95
      %p97 = scmp.ne.s32.totalorder %s89, %s92
      %p98 = scmp.eq.s32.totalorder %s27, 0
      %p99 = por %p97, %p98
      %p100 = scmp.ne.s32.totalorder %s89, %s92
      %p101 = scmp.eq.s32.totalorder %s32, 1
      %p102 = por %p100, %p101
      %p103 = scmp.ne.s32.totalorder %s92, %s93
      %p104 = scmp.eq.s32.totalorder %s32, 0
      %p105 = por %p103, %p104
      %p106 = scmp.ne.s32.totalorder %s92, %s93
      %p107 = scmp.eq.s32.totalorder %s33, 1
      %p108 = por %p106, %p107
      %p110 = scmp.ne.s32.totalorder %s93, %s109
      %p111 = scmp.eq.s32.totalorder %s33, 0
      %p112 = por %p110, %p111
      %s114 = sadd.s32 %s113, 1
      %p117 = scmp.eq.s32.totalorder %s27, 1
      %p118 = scmp.ne.s32.totalorder %s113, %s115
      %p119 = scmp.eq.s32.totalorder %s27, 0
      %p120 = por %p118, %p119
      %p121 = scmp.ne.s32.totalorder %s113, %s115
      %p122 = scmp.eq.s32.totalorder %s32, 1
      %p123 = por %p121, %p122
      %p124 = scmp.ne.s32.totalorder %s115, %s116
      %p125 = scmp.eq.s32.totalorder %s32, 0
      %p126 = por %p124, %p125
      %p127 = scmp.ne.s32.totalorder %s115, %s116
      %p128 = scmp.eq.s32.totalorder %s33, 1
      %p129 = por %p127, %p128
      %p131 = scmp.ne.s32.totalorder %s116, %s130
      %p132 = scmp.eq.s32.totalorder %s33, 0
      %p133 = por %p131, %p132
      %s135 = sadd.s32 %s134, 1
      %p138 = scmp.eq.s32.totalorder %s27, 1
      %p139 = scmp.ne.s32.totalorder %s134, %s136
      %p140 = scmp.eq.s32.totalorder %s27, 0
      %p141 = por %p139, %p140
      %p142 = scmp.ne.s32.totalorder %s134, %s136
      %p143 = scmp.eq.s32.totalorder %s32, 1
      %p144 = por %p142, %p143
      %p145 = scmp.ne.s32.totalorder %s136, %s137
      %p146 = scmp.eq.s32.totalorder %s32, 0
      %p147 = por %p145, %p146
      %p148 = scmp.ne.s32.totalorder %s136, %s137
      %p149 = scmp.eq.s32.totalorder %s33, 1
      %p150 = por %p148, %p149
      %p152 = scmp.ne.s32.totalorder %s137, %s151
      %p153 = scmp.eq.s32.totalorder %s33, 0
      %p154 = por %p152, %p153
      %s155 = ssub.s32 %s27, %s34
      %p156 = scmp.eq.s32.totalorder %s155, 0
      %s158 = sadd.s32 %s157, 1
      %s159 = scalar_select %p156, %s157, %s158
      %p162 = pneg %p156
      %p163 = scmp.eq.s32.totalorder %s27, 1
      %p164 = por %p162, %p163
      %p165 = scmp.ne.s32.totalorder %s157, %s160
      %p166 = scmp.eq.s32.totalorder %s27, 0
      %p167 = por %p165, %p166
      %p168 = scmp.ne.s32.totalorder %s157, %s160
      %p169 = scmp.eq.s32.totalorder %s32, 1
      %p170 = por %p168, %p169
      %p171 = scmp.ne.s32.totalorder %s160, %s161
      %p172 = scmp.eq.s32.totalorder %s32, 0
      %p173 = por %p171, %p172
      %p174 = scmp.ne.s32.totalorder %s160, %s161
      %p175 = scmp.eq.s32.totalorder %s33, 1
      %p176 = por %p174, %p175
      %p178 = scmp.ne.s32.totalorder %s161, %s177
      %p179 = scmp.eq.s32.totalorder %s33, 0
      %p180 = por %p178, %p179
      %s181 = ssub.s32 %s27, %s34
      %p182 = scmp.eq.s32.totalorder %s181, 0
      %s184 = sadd.s32 %s183, 1
      %s185 = scalar_select %p182, %s183, %s184
      %p188 = pneg %p182
      %p189 = scmp.eq.s32.totalorder %s27, 1
      %p190 = por %p188, %p189
      %p191 = scmp.ne.s32.totalorder %s183, %s186
      %p192 = scmp.eq.s32.totalorder %s27, 0
      %p193 = por %p191, %p192
      %p194 = scmp.ne.s32.totalorder %s183, %s186
      %p195 = scmp.eq.s32.totalorder %s32, 1
      %p196 = por %p194, %p195
      %p197 = scmp.ne.s32.totalorder %s186, %s187
      %p198 = scmp.eq.s32.totalorder %s32, 0
      %p199 = por %p197, %p198
      %p200 = scmp.ne.s32.totalorder %s186, %s187
      %p201 = scmp.eq.s32.totalorder %s33, 1
      %p202 = por %p200, %p201
      %p204 = scmp.ne.s32.totalorder %s187, %s203
      %p205 = scmp.eq.s32.totalorder %s33, 0
      %p206 = por %p204, %p205
      %p207 = scmp.le.s32.totalorder 1, %s27
      %p208 = scmp.lt.s32.totalorder %s27, 3
      %p209 = pnand %p207, %p208
      %p210 = pneg %p209
      // Predicated region
      $region9: #{tpu_custom_call.1} parent=5 // pred_check
        _
      $region10: #{tpu_custom_call.1} parent=5 // pred_check_branch
        %212 = sbr.rel (%p209) target = $region12
      $region11: #{tpu_custom_call.1} parent=5 // pred_region
        %s213 = ssub.s32 %s27, 1
        // Predicated region
        $region13: #{tpu_custom_call.1} parent=11 // pred_check
          %p214 = pneg %p126
        $region14: #{tpu_custom_call.1} parent=11 // pred_check_branch
          %216 = sbr.rel (%p214) target = $region16
        $region15: #{tpu_custom_call.1} parent=11 // pred_region
          _
        $region16: #{tpu_custom_call.1} parent=11 // pred_fallthru
          _
        // Predicated region
        $region17: #{tpu_custom_call.1} parent=11 // pred_check
          %p217 = pneg %p147
        $region18: #{tpu_custom_call.1} parent=11 // pred_check_branch
          %219 = sbr.rel (%p217) target = $region20
        $region19: #{tpu_custom_call.1} parent=11 // pred_region
          _
        $region20: #{tpu_custom_call.1} parent=11 // pred_fallthru
          _
      $region12: #{tpu_custom_call.1} parent=5 // pred_fallthru
        _
      %p220 = scmp.lt.s32.totalorder %s27, 2
      // Predicated region
      $region21: #{tpu_custom_call.1} parent=5 // pred_check
        %p221 = pneg %p220
      $region22: #{tpu_custom_call.1} parent=5 // pred_check_branch
        %223 = sbr.rel (%p221) target = $region24
      $region23: #{tpu_custom_call.1} parent=5 // pred_region
        // Predicated region
        $region25: #{tpu_custom_call.1} parent=23 // pred_check
          %p224 = pneg %p47
        $region26: #{tpu_custom_call.1} parent=23 // pred_check_branch
          %226 = sbr.rel (%p224) target = $region28
        $region27: #{tpu_custom_call.1} parent=23 // pred_region
          %p227 = scmp.lt.s32.totalorder %s27, 1
          %s228 = scalar_select %p227, %s27, 1
          %s229 = smul.addr %s228, 2
          %s230 = smul.addr %s229, 8
          %s231 = scalar_lea.vmem %s2, %s230
        $region28: #{tpu_custom_call.1} parent=23 // pred_fallthru
          _
        // Predicated region
        $region29: #{tpu_custom_call.1} parent=23 // pred_check
          %p232 = pneg %p73
        $region30: #{tpu_custom_call.1} parent=23 // pred_check_branch
          %234 = sbr.rel (%p232) target = $region32
        $region31: #{tpu_custom_call.1} parent=23 // pred_region
          %p235 = scmp.lt.s32.totalorder %s27, 1
          %s236 = scalar_select %p235, %s27, 1
          %s237 = smul.addr %s236, 2
          %s238 = smul.addr %s237, 8
          %s239 = scalar_lea.vmem %s3, %s238
        $region32: #{tpu_custom_call.1} parent=23 // pred_fallthru
          _
        // Predicated region
        $region33: #{tpu_custom_call.1} parent=23 // pred_check
          %p240 = pneg %p99
        $region34: #{tpu_custom_call.1} parent=23 // pred_check_branch
          %242 = sbr.rel (%p240) target = $region36
        $region35: #{tpu_custom_call.1} parent=23 // pred_region
          %p243 = scmp.lt.s32.totalorder %s27, 1
          %s244 = scalar_select %p243, %s27, 1
          %s245 = smul.addr %s244, 2
          %s246 = smul.addr %s245, 8
          %s247 = scalar_lea.vmem %s4, %s246
        $region36: #{tpu_custom_call.1} parent=23 // pred_fallthru
          _
        // Predicated region
        $region37: #{tpu_custom_call.1} parent=23 // pred_check
          %p248 = pneg %p167
        $region38: #{tpu_custom_call.1} parent=23 // pred_check_branch
          %250 = sbr.rel (%p248) target = $region40
        $region39: #{tpu_custom_call.1} parent=23 // pred_region
          %p251 = scmp.lt.s32.totalorder %s27, 1
          %s252 = scalar_select %p251, %s27, 1
          %s253 = smul.addr %s252, 2
          %s254 = smul.addr %s253, 8
          %s255 = scalar_lea.vmem %s7, %s254
        $region40: #{tpu_custom_call.1} parent=23 // pred_fallthru
          _
      $region24: #{tpu_custom_call.1} parent=5 // pred_fallthru
        _
      %p256 = scmp.le.s32.totalorder 1, %s27
      %p257 = scmp.lt.s32.totalorder %s27, 3
      %p258 = pnand %p256, %p257
      %p259 = pneg %p258
      // Predicated region
      $region41: #{tpu_custom_call.1} parent=5 // pred_check
        _
      $region42: #{tpu_custom_call.1} parent=5 // pred_check_branch
        %261 = sbr.rel (%p258) target = $region44
      $region43: #{tpu_custom_call.1} parent=5 // pred_region
        %s262 = ssub.s32 %s27, 1
        %p263 = scmp.lt.s32.totalorder %s32, 1
        %s264 = scalar_select %p263, %s32, 1
        %s265 = smul.addr %s264, 2
        %s266 = smul.addr %s265, 8
        %s267 = scalar_lea.vmem %s2, %s266
        %p268 = pneg %p53
        %p269 = pneg %p50
        %p270 = scmp.lt.s32.totalorder %s32, 1
        %s271 = scalar_select %p270, %s32, 1
        %s272 = smul.addr %s271, 2
        %s273 = smul.addr %s272, 8
        %s274 = scalar_lea.vmem %s3, %s273
        %p275 = pneg %p79
        %p276 = pneg %p76
        %p277 = scmp.lt.s32.totalorder %s32, 1
        %s278 = scalar_select %p277, %s32, 1
        %s279 = smul.addr %s278, 2
        %s280 = smul.addr %s279, 8
        %s281 = scalar_lea.vmem %s4, %s280
        %p282 = pneg %p105
        %p283 = pneg %p102
        %p284 = pneg %p126
        %p285 = pneg %p123
        %p286 = pneg %p147
        %p287 = pneg %p144
        %p288 = scmp.lt.s32.totalorder %s32, 1
        %s289 = scalar_select %p288, %s32, 1
        %s290 = smul.addr %s289, 2
        %s291 = smul.addr %s290, 8
        %s292 = scalar_lea.vmem %s7, %s291
        %p293 = pneg %p173
        %p294 = pneg %p170
        %p295 = pneg %p199
        %p296 = pneg %p196
        %s297 = sand.u32 %s186, 1
        %s298 = scalar_lea.sflag [#allocation6], %s297
        %s299 = sand.u32 %s186, 1
        %s300 = smul.addr %s299, 8
        %s301 = scalar_lea.vmem [#allocation5], %s300
        %p302 = scmp.lt.s32.totalorder %s32, 1
        %s303 = scalar_select %p302, %s32, 1
        %s304 = smul.addr %s303, 2
        %s305 = smul.addr %s304, 8
        %s306 = scalar_lea.vmem %s2, %s305
        %p307 = scmp.lt.s32.totalorder %s32, 1
        %s308 = scalar_select %p307, %s32, 1
        %s309 = smul.addr %s308, 2
        %s310 = smul.addr %s309, 8
        %s311 = scalar_lea.vmem %s3, %s310
        %p312 = scmp.lt.s32.totalorder %s32, 1
        %s313 = scalar_select %p312, %s32, 1
        %s314 = smul.addr %s313, 2
        %s315 = smul.addr %s314, 8
        %s316 = scalar_lea.vmem %s4, %s315
        %p317 = scmp.lt.s32.totalorder %s32, 1
        %s318 = scalar_select %p317, %s32, 1
        %s319 = smul.addr %s318, 2
        %s320 = smul.addr %s319, 8
        %s321 = scalar_lea.vmem %s7, %s320
        %v322 = vld [vmem:[%s306] sm:$0xff]
        %v323 = vld [vmem:[%s306 + $0x8] sm:$0xff]
        %v324 = vld [vmem:[%s311] sm:$0xff]
        %v325 = vld [vmem:[%s311 + $0x8] sm:$0xff]
        %v326 = vsub.f32 %v324, %v322
        %v327 = vsub.f32 %v325, %v323
        %v328 = vld [vmem:[%s316] sm:$0xff]
        %v329 = vld [vmem:[%s316 + $0x8] sm:$0xff]
        %v330 = vsub.f32 %v328, %v322
        %v331 = vsub.f32 %v329, %v323
        %v332 = vmul.f32 %v326, %v326
        %v333 = vmul.f32 %v327, %v327
        %vm334 = vcmask 64512
        %v335 = vsel %vm334, %v332, 0.0
        %v336 = vsel %vm334, %v333, 0.0
        %v337 = vadd.f32 %v335, %v336
        %338 = vadd.xlane.f32.xlu0 %v337
        %v339 = vpop.xlane.xlu0 %338
        %v340 = vrot.slane %v339, 4
        %v341 = vadd.f32 %v339, %v340
        %v342 = vrot.slane %v341, 2
        %v343 = vadd.f32 %v341, %v342
        %v344 = vrot.slane %v343, 1
        %v345 = vadd.f32 %v343, %v344
        %s346 = vtos %v345
        %v347 = vmul.f32 %v330, %v330
        %v348 = vmul.f32 %v331, %v331
        %v349 = vsel %vm334, %v347, 0.0
        %v350 = vsel %vm334, %v348, 0.0
        %v351 = vadd.f32 %v349, %v350
        %352 = vadd.xlane.f32.xlu0 %v351
        %v353 = vpop.xlane.xlu0 %352
        %v354 = vrot.slane %v353, 4
        %v355 = vadd.f32 %v353, %v354
        %v356 = vrot.slane %v355, 2
        %v357 = vadd.f32 %v355, %v356
        %v358 = vrot.slane %v357, 1
        %v359 = vadd.f32 %v357, %v358
        %s360 = vtos %v359
        %v361 = vld [vmem:[%s6] sm:$0x3]
        %v362 = vld [vmem:[%s5] sm:$0x3]
        %v363 = vmax.f32 %v361, 0.0
        %v364 = vmul.f32 %v361, %v362
        %v365 = vsub.f32 %v363, %v364
        %v366 = vand.u32 2147483647, %v361
        %v367 = vsub.f32 0.0, %v366
        %v368 = vmul.f32 %v367, 1.442695
        %v369 = vpow.pop %v368
        %v370 = vadd.f32 %v369, 1.0
        %v371 = vlog2.pop %v370
        %v372 = vmul.f32 %v371, 0.6931472
        %v373 = vmul.f32 -0.5, %v369
        %v374 = vadd.f32 %v373, 1.0
        %v375 = vmul.f32 %v374, %v369
        %v376 = vand.u32 2147483647, %v369
        %vm377 = vcmp.lt.f32.partialorder %v376, 0.0004427343
        %v378 = vsel %vm377, %v375, %v372
        %v379 = vadd.f32 %v365, %v378
        %p380 = scmp.eq.s32.totalorder %s32, 0
        %vm381 = vcmask 123904
        %v382 = vsel %vm381, %v379, 0.0
        %383 = vadd.xlane.f32.xlu0 %v382
        %v384 = vpop.xlane.xlu0 %383
        %v385 = vrot.slane %v384, 4
        %v386 = vadd.f32 %v384, %v385
        %v387 = vrot.slane %v386, 2
        %v388 = vadd.f32 %v386, %v387
        %v389 = vrot.slane %v388, 1
        %v390 = vadd.f32 %v388, %v389
        %s391 = vtos %v390
        %s392 = scalar_select %p380, %s391, 0.0
        %v393 = vlaneseq
        %v394 = vshrl.u32 %v393, 7
        %v395 = vadd.s32 %v394, 8
        %v396 = vlaneseq
        %v397 = vand.u32 %v396, 127
        %v398 = vcvt.s32.f32 %v394
        %v399 = vcvt.s32.f32 %v395
        %v400 = vcvt.s32.f32 %v397
        %s401 = sld [smem:[#allocation3 + %s32]]
        %s402 = sld [smem:[#allocation4 + %s32]]
        %s403 = scvt.s32.f32 %s401
        %v404 = vstv %s403
        %v405 = vrcp.pop %v404
        %s406 = vtos %v405
        %s407 = scvt.s32.f32 %s402
        %v408 = vstv %s407
        %v409 = vrcp.pop %v408
        %s410 = vtos %v409
        %v411 = vld [vmem:[%s321] sm:$0xff]
        %v412 = vld [vmem:[%s321 + $0x8] sm:$0xf]
        %v413 = vstv %s406
        %v414 = vmul.f32 %v400, %v413
        %v415 = vstv %s410
        %v416 = vmul.f32 %v398, %v415
        %v417 = vmul.f32 %v399, %v415
        %v418 = vsub.f32 %v414, %v416
        %v419 = vsub.f32 %v414, %v417
        %v420 = vmul.f32 %v418, %v418
        %v421 = vmul.f32 %v419, %v419
        %v422 = vmul.f32 %v420, -3.125
        %v423 = vmul.f32 %v421, -3.125
        %v424 = vmul.f32 %v422, 1.442695
        %v425 = vpow.pop %v424
        %v426 = vmul.f32 %v423, 1.442695
        %v427 = vpow.pop %v426
        %v428 = vsub.f32 1.0, %v425
        %v429 = vsub.f32 1.0, %v427
        %v430 = vstv %s401
        %vm431 = vcmp.lt.s32.totalorder %v397, %v430
        %v432 = vstv %s402
        %vm433 = vcmp.lt.s32.totalorder %v394, %v432
        %vm434 = vcmp.lt.s32.totalorder %v395, %v432
        %vm435 = vmand %vm431, %vm433
        %vm436 = vmand %vm431, %vm434
        %v437 = vmul.f32 %v428, %v411
        %v438 = vmul.f32 %v429, %v412
        %v439 = vsel %vm435, %v437, 0.0
        %v440 = vsel %vm436, %v438, 0.0
        %vm441 = vcmask 80896
        %v442 = vsel %vm441, %v439, 0.0
        %vm443 = vcmask 76800
        %v444 = vsel %vm443, %v440, 0.0
        %v445 = vadd.f32 %v442, %v444
        %446 = vadd.xlane.f32.xlu0 %v445
        %v447 = vpop.xlane.xlu0 %446
        %v448 = vrot.slane %v447, 4
        %v449 = vadd.f32 %v447, %v448
        %v450 = vrot.slane %v449, 2
        %v451 = vadd.f32 %v449, %v450
        %v452 = vrot.slane %v451, 1
        %v453 = vadd.f32 %v451, %v452
        %s454 = vtos %v453
        %s455 = sadd.f32 %s454, 0.0
        %vm456 = vcmp.eq.s32.totalorder %v397, 0
        %vm457 = vcmp.eq.s32.totalorder %v397, 1
        %vm458 = vcmp.eq.s32.totalorder %v397, 2
        %v459 = vstv %s392
        %v460 = vstv %s455
        %v461 = vsel %vm458, %v459, %v460
        %v462 = vstv %s360
        %v463 = vsel %vm457, %v462, %v461
        %v464 = vstv %s346
        %v465 = vsel %vm456, %v464, %v463
        %466 = vst [vmem:[%s301] sm:$0xff] %v465
        %s467 = sand.u32 %s186, 1
        %s468 = scalar_lea.sflag [#allocation6], %s467
        %s469 = sand.u32 %s186, 1
        %s470 = smul.addr %s469, 8
        %s471 = scalar_lea.vmem [#allocation5], %s470
        // Predicated region
        $region45: #{tpu_custom_call.1} parent=43 // pred_check
          %p472 = pneg %p196
        $region46: #{tpu_custom_call.1} parent=43 // pred_check_branch
          %474 = sbr.rel (%p472) target = $region48
        $region47: #{tpu_custom_call.1} parent=43 // pred_region
          %s476 = ssub.s32 128, 128
          %477 = vsyncadd %s468, %s476
          %s478 = smul.addr %s32, 128
          %s479 = scalar_lea.hbm %s8, %s478
          %s481 = sshll.u32 %s471, 4
          %s482 = int_to_ptr.vmem [resolvable:$true] %s481
          %484 = dma.vmem_to_hbm [thread:$0]  %s482, 128, %s479, %s468
        $region48: #{tpu_custom_call.1} parent=43 // pred_fallthru
          _
      $region44: #{tpu_custom_call.1} parent=5 // pred_fallthru
        _
      %p485 = scmp.le.s32.totalorder 2, %s27
      // Predicated region
      $region49: #{tpu_custom_call.1} parent=5 // pred_check
        %p486 = pneg %p485
      $region50: #{tpu_custom_call.1} parent=5 // pred_check_branch
        %488 = sbr.rel (%p486) target = $region52
      $region51: #{tpu_custom_call.1} parent=5 // pred_region
        %s489 = ssub.s32 %s27, 2
        // Predicated region
        $region53: #{tpu_custom_call.1} parent=51 // pred_check
          %p490 = pneg %p202
        $region54: #{tpu_custom_call.1} parent=51 // pred_check_branch
          %492 = sbr.rel (%p490) target = $region56
        $region55: #{tpu_custom_call.1} parent=51 // pred_region
          %s493 = sand.u32 %s187, 1
          %s494 = scalar_lea.sflag [#allocation6], %s493
          %s495 = sand.u32 %s187, 1
          %s496 = smul.addr %s495, 8
          %s497 = scalar_lea.vmem [#allocation5], %s496
          %498 = dma.done %s494, 128
        $region56: #{tpu_custom_call.1} parent=51 // pred_fallthru
          _
      $region52: #{tpu_custom_call.1} parent=5 // pred_fallthru
        _
    $region6: #{tpu_custom_call.1} parent=1 // loop_footer
      %s31 = sadd.s32 1, %s27
    $region7: #{tpu_custom_call.1} parent=1 // loop_footer_branch
      %26 = sbr.rel target = $region3
    $region8: #{tpu_custom_call.1} parent=1 // loop_exit
      _
    %499 = vsyncpa [#allocation6], 1
    %s500 = scalar_lea.sflag [#allocation6], 1
    %501 = vsyncpa %s500, 1

</llo_original>
